<compile_context>
chip_gen: v7x
topology: tpu7x:2x2x1
jax: 0.10.0
libtpu: 0.0.40
codegen_flags: <defaults>
</compile_context>

<pallas_src>
import functools

import jax
import jax.numpy as jnp
from jax.experimental import pallas as pl
from jax.experimental.pallas import tpu as pltpu


def _label_smoothing_kernel(x_ref, tgt_ref, loss_ref, *, confidence, smoothing):
    x = x_ref[...].astype(jnp.float32)          # (tile_n, C), f32 for stability
    tgt = tgt_ref[...]                          # (tile_n, 1) int32
    c = x.shape[-1]

    # Numerically-stable logsumexp over the lane (class) axis.
    m = jnp.max(x, axis=-1, keepdims=True)                              # (tile_n, 1)
    lse = m + jnp.log(jnp.sum(jnp.exp(x - m), axis=-1, keepdims=True))  # (tile_n, 1)

    # mean(x) over classes (single pass, no logprobs materialized).
    mean_x = jnp.sum(x, axis=-1, keepdims=True) * (1.0 / c)             # (tile_n, 1)

    # Gather x[target] via iota/compare mask (VPU compare + XLU reduce; no MXU).
    col = jax.lax.broadcasted_iota(jnp.int32, x.shape, 1)               # (tile_n, C)
    x_tgt = jnp.sum(jnp.where(col == tgt, x, 0.0), axis=-1, keepdims=True)

    # Fused label-smoothing loss per row.
    loss_ref[...] = lse - confidence * x_tgt - smoothing * mean_x       # (tile_n, 1)


def _choose_tile_n(n, c, itemsize, per_buffer_budget=6 << 20):
    """Largest multiple-of-8 row tile whose x block stays under the budget
    (2 pipeline buffers of it then fit comfortably in scoped VMEM on all gens)."""
    rows = per_buffer_budget // max(1, c * itemsize)
    rows = max(8, min(rows, 1024))
    rows = (rows // 8) * 8
    n_pad = ((n + 7) // 8) * 8
    return max(8, min(rows, n_pad))


def label_smoothing_loss(x, target, smoothing=0.1, tile_n=None):
    """x: [N, C] float logits (f32 or bf16); target: [N] int class indices.
    Returns scalar f32 mean loss."""
    n, c = x.shape
    confidence = 1.0 - smoothing
    if tile_n is None:
        tile_n = _choose_tile_n(n, c, jnp.dtype(x.dtype).itemsize)
    num_tiles = pl.cdiv(n, tile_n)

    tgt2d = target.astype(jnp.int32).reshape(n, 1)

    kernel = functools.partial(
        _label_smoothing_kernel,
        confidence=float(confidence),
        smoothing=float(smoothing),
    )

    per_row = pl.pallas_call(
        kernel,
        out_shape=jax.ShapeDtypeStruct((n, 1), jnp.float32),
        grid=(num_tiles,),
        in_specs=[
            pl.BlockSpec((tile_n, c), lambda i: (i, 0)),   # logits row tile
            pl.BlockSpec((tile_n, 1), lambda i: (i, 0)),   # target indices tile
        ],
        out_specs=pl.BlockSpec((tile_n, 1), lambda i: (i, 0)),  # per-row losses
        compiler_params=pltpu.CompilerParams(
            dimension_semantics=("parallel",),             # megacore on v7x
            vmem_limit_bytes=32 << 20,                     # safe on v5e/v6e/v7x
        ),
    )(x, tgt2d)

    return jnp.sum(per_row) / n


def _reference(x, target, smoothing):
    confidence = 1.0 - smoothing
    logprobs = jax.nn.log_softmax(x.astype(jnp.float32), axis=-1)
    nll = -jnp.take_along_axis(
        logprobs, target[:, None].astype(jnp.int32), axis=-1)[:, 0]
    smooth = -jnp.mean(logprobs, axis=-1)
    return jnp.mean(confidence * nll + smoothing * smooth)


if __name__ == "__main__":
    key = jax.random.PRNGKey(0)
    kx, kt, kx2, kt2 = jax.random.split(key, 4)
    smoothing = 0.1

    # Case 1: small shape matching the module's forward (N rows, C classes).
    N, C = 8, 32
    x = jax.random.normal(kx, (N, C), dtype=jnp.float32)
    target = jax.random.randint(kt, (N,), 0, C, dtype=jnp.int32)

    loss = label_smoothing_loss(x, target, smoothing=smoothing)
    loss = jax.block_until_ready(loss)
    ref = _reference(x, target, smoothing)
    assert jnp.allclose(loss, ref, atol=1e-5, rtol=1e-5), (loss, ref)

    # Case 2: multi-tile grid with a ragged last tile (exercises block clipping).
    N2, C2 = 20, 32
    x2 = jax.random.normal(kx2, (N2, C2), dtype=jnp.float32)
    target2 = jax.random.randint(kt2, (N2,), 0, C2, dtype=jnp.int32)

    loss2 = label_smoothing_loss(x2, target2, smoothing=smoothing, tile_n=8)
    loss2 = jax.block_until_ready(loss2)
    ref2 = _reference(x2, target2, smoothing)
    assert jnp.allclose(loss2, ref2, atol=1e-5, rtol=1e-5), (loss2, ref2)

    print("KERNEL_OK")
</pallas_src>

<mosaic_0001>
module attributes {stable_mosaic.version = 11 : i64} {
  func.func @_label_smoothing_kernel(%arg0: i32, %arg1: memref<8x32xf32, #tpu.memory_space<vmem>>, %arg2: memref<8x1xi32, #tpu.memory_space<vmem>>, %arg3: memref<8x1xf32, #tpu.memory_space<vmem>>) attributes {dimension_semantics = [#tpu.dimension_semantics<parallel>], iteration_bounds = array<i64: 1>, scalar_prefetch = 0 : i64, scratch_operands = 0 : i64, tpu.core_type = #tpu.core_type<tc>, window_params = [{transform_indices = @transform_0, window_bounds = array<i64: 8, 32>}, {transform_indices = @transform_1, window_bounds = array<i64: 8, 1>}, {transform_indices = @transform_2, window_bounds = array<i64: 8, 1>}]} {
    %c0 = arith.constant 0 : index
    %c0_0 = arith.constant 0 : index
    %0 = vector.load %arg1[%c0, %c0_0] : memref<8x32xf32, #tpu.memory_space<vmem>>, vector<8x32xf32>
    %c0_1 = arith.constant 0 : index
    %c0_2 = arith.constant 0 : index
    %1 = vector.load %arg2[%c0_1, %c0_2] : memref<8x1xi32, #tpu.memory_space<vmem>>, vector<8x1xi32>
    %cst = arith.constant dense<0xFF800000> : vector<8xf32>
    %2 = vector.multi_reduction <maximumf>, %0, %cst [1] : vector<8x32xf32> to vector<8xf32>
    %3 = vector.shape_cast %2 : vector<8xf32> to vector<8x1xf32>
    %4 = vector.broadcast %3 : vector<8x1xf32> to vector<8x32xf32>
    %5 = arith.subf %0, %4 : vector<8x32xf32>
    %6 = math.exp %5 : vector<8x32xf32>
    %cst_3 = arith.constant dense<0.000000e+00> : vector<8xf32>
    %7 = vector.multi_reduction <add>, %6, %cst_3 [1] : vector<8x32xf32> to vector<8xf32>
    %8 = vector.shape_cast %7 : vector<8xf32> to vector<8x1xf32>
    %9 = math.log %8 : vector<8x1xf32>
    %10 = arith.addf %3, %9 : vector<8x1xf32>
    %cst_4 = arith.constant dense<0.000000e+00> : vector<8xf32>
    %11 = vector.multi_reduction <add>, %0, %cst_4 [1] : vector<8x32xf32> to vector<8xf32>
    %12 = vector.shape_cast %11 : vector<8xf32> to vector<8x1xf32>
    %cst_5 = arith.constant 3.125000e-02 : f32
    %13 = vector.broadcast %cst_5 : f32 to vector<8x1xf32>
    %14 = arith.mulf %12, %13 : vector<8x1xf32>
    %15 = tpu.iota {dimensions = array<i32: 1>} : vector<8x32xi32>
    %16 = vector.broadcast %1 : vector<8x1xi32> to vector<8x32xi32>
    %17 = arith.cmpi eq, %15, %16 : vector<8x32xi32>
    %cst_6 = arith.constant 0.000000e+00 : f32
    %18 = vector.broadcast %cst_6 : f32 to vector<8x32xf32>
    %19 = arith.select %17, %0, %18 : vector<8x32xi1>, vector<8x32xf32>
    %cst_7 = arith.constant dense<0.000000e+00> : vector<8xf32>
    %20 = vector.multi_reduction <add>, %19, %cst_7 [1] : vector<8x32xf32> to vector<8xf32>
    %21 = vector.shape_cast %20 : vector<8xf32> to vector<8x1xf32>
    %cst_8 = arith.constant 0.899999976 : f32
    %22 = vector.broadcast %cst_8 : f32 to vector<8x1xf32>
    %23 = arith.mulf %22, %21 : vector<8x1xf32>
    %24 = arith.subf %10, %23 : vector<8x1xf32>
    %cst_9 = arith.constant 1.000000e-01 : f32
    %25 = vector.broadcast %cst_9 : f32 to vector<8x1xf32>
    %26 = arith.mulf %25, %14 : vector<8x1xf32>
    %27 = arith.subf %24, %26 : vector<8x1xf32>
    %c0_10 = arith.constant 0 : index
    %c0_11 = arith.constant 0 : index
    %28 = vector.load %arg3[%c0_10, %c0_11] : memref<8x1xf32, #tpu.memory_space<vmem>>, vector<8x1xf32>
    tpu.vector_store %arg3[%c0_10, %c0_11], %27 {strides = array<i32>} : memref<8x1xf32, #tpu.memory_space<vmem>>, vector<8x1xf32>,
    return
  }
  func.func @transform_0(%arg0: i32) -> (i32, i32) {
    %c0_i32 = arith.constant 0 : i32
    %c0_i32_0 = arith.constant 0 : i32
    return %arg0, %c0_i32 : i32, i32
  }
  func.func @transform_1(%arg0: i32) -> (i32, i32) {
    %c0_i32 = arith.constant 0 : i32
    %c0_i32_0 = arith.constant 0 : i32
    return %arg0, %c0_i32 : i32, i32
  }
  func.func @transform_2(%arg0: i32) -> (i32, i32) {
    %c0_i32 = arith.constant 0 : i32
    %c0_i32_0 = arith.constant 0 : i32
    return %arg0, %c0_i32 : i32, i32
  }
}

</mosaic_0001>

<llo_original>
// kernel: tpu_custom_call.1
$region0: #{tpu_custom_call.1}
  #allocation0 [shape = 'u32[]', space=smem, size = 0x4, offset = 0x4, fixed_abs, tag = 'smem constant byte address 0x4 - core index']
  #allocation1 [shape = 'u32[144,128]{1,0:T(1,128)}', space=vmem, size = 0x12000, scoped, tag = 'internal scratch']
  %s0 = inlined_call_operand.vmem [shape: f32[8,32], index: 0, kind: input, shape index: {}]
  %s1 = inlined_call_operand.vmem [shape: s32[8,1], index: 1, kind: input, shape index: {}]
  %s2 = inlined_call_operand.vmem [shape: f32[8,1], index: 2, kind: output, shape index: {}]
  %s3 = sld [smem:[#allocation0]]
  $region18: #{tpu_custom_call.1} parent=0
    _
  %s5 = ssub.s32 1, %s3
  %s6 = scalar_select 0, %s5, %s3
  // Predicated region
  $region2: #{tpu_custom_call.1} parent=0 // pred_check
    _
  $region3: #{tpu_custom_call.1} parent=0 // pred_check_branch
    %8 = sbr.rel (0) target = $region5
  $region4: #{tpu_custom_call.1} parent=0 // pred_region
    _
  $region5: #{tpu_custom_call.1} parent=0 // pred_fallthru
    _
  // Predicated region
  $region6: #{tpu_custom_call.1} parent=0 // pred_check
    _
  $region7: #{tpu_custom_call.1} parent=0 // pred_check_branch
    %10 = sbr.rel (0) target = $region9
  $region8: #{tpu_custom_call.1} parent=0 // pred_region
    _
  $region9: #{tpu_custom_call.1} parent=0 // pred_fallthru
    _
  %v11 = vld [vmem:[%s0] sm:$0xff]
  %v12 = vld [vmem:[%s1] sm:$0xff]
  %vm13 = vcmask 261120
  %v14 = vsel %vm13, %v11, -inf
  %15 = vmax.xlane.f32.xlu0 %v14
  %v16 = vpop.xlane.xlu0 %15
  %v17 = vsub.f32 %v11, %v16
  %v18 = vmul.f32 %v17, 1.442695
  %v19 = vpow.pop %v18
  %v20 = vsel %vm13, %v19, 0.0
  %21 = vadd.xlane.f32.xlu0 %v20
  %v22 = vpop.xlane.xlu0 %21
  %v23 = vlog2.pop %v22
  %v24 = vmul.f32 %v23, 0.6931472
  %v25 = vadd.f32 %v16, %v24
  %v26 = vsel %vm13, %v11, 0.0
  %27 = vadd.xlane.f32.xlu0 %v26
  %v28 = vpop.xlane.xlu0 %27
  %v29 = vmul.f32 %v28, 0.03125
  %v30 = vlaneseq
  %v31 = vand.u32 %v30, 127
  %32 = vset.pattern.permute.xlu0 0
  %33 = vperm.xlu0 %32, %v12
  %v34 = vpop.permute.xlu0 %33
  %vm35 = vcmp.eq.s32.totalorder %v31, %v34
  %v36 = vsel %vm35, %v11, 0.0
  %v37 = vsel %vm13, %v36, 0.0
  %38 = vadd.xlane.f32.xlu0 %v37
  %v39 = vpop.xlane.xlu0 %38
  %v40 = vmul.f32 %v39, 0.9
  %v41 = vsub.f32 %v25, %v40
  %v42 = vmul.f32 %v29, 0.1
  %v43 = vsub.f32 %v41, %v42
  %vm44 = vcmask 7168
  %45 = vst.msk [vmem:[%s2] sm:$0xff] %vm44, %v43
  // Predicated region
  $region10: #{tpu_custom_call.1} parent=0 // pred_check
    _
  $region11: #{tpu_custom_call.1} parent=0 // pred_check_branch
    %47 = sbr.rel (0) target = $region13
  $region12: #{tpu_custom_call.1} parent=0 // pred_region
    _
  $region13: #{tpu_custom_call.1} parent=0 // pred_fallthru
    _
  // Predicated region
  $region14: #{tpu_custom_call.1} parent=0 // pred_check
    _
  $region15: #{tpu_custom_call.1} parent=0 // pred_check_branch
    %49 = sbr.rel (0) target = $region17
  $region16: #{tpu_custom_call.1} parent=0 // pred_region
    _
  $region17: #{tpu_custom_call.1} parent=0 // pred_fallthru
    _

</llo_original>
